<compile_context>
chip_gen: v5e
topology: v5e:2x2
jax: 0.10.0
libtpu: 0.0.40
codegen_flags: <defaults>
</compile_context>

<pallas_src>
import functools

import jax
import jax.numpy as jnp
from jax.experimental import pallas as pl
from jax.experimental.pallas import tpu as pltpu


MAX_TB = 2048  # upper bound on the lane-axis batch tile (multiple of 256)


def _pick_batch_tile(batch, max_tb=MAX_TB):
    """Batch tile (multiple of 256) and padded batch.

    Grows the tile to amortize per-grid-step overhead, but stops doubling
    while it would leave fewer than 2 grid steps, so the "parallel" axis can
    still shard across v7x's two TensorCores for larger batches.
    """
    tb = 256
    while tb * 2 <= max_tb and batch > tb * 2:
        tb *= 2
    bp = ((batch + tb - 1) // tb) * tb
    return tb, bp


def policy_mlp_kernel(x_ref, w1_ref, b1_ref, w2_ref, b2_ref, w3_ref, b3_ref,
                      out_ref, *, cb, n_chunks):
    # Weights/biases use constant index_maps: DMA'd once, VMEM-resident.
    w1 = w1_ref[...]            # [64, 8]   (compute dtype)
    b1 = b1_ref[...]            # [64, 1]   f32
    w2 = w2_ref[...]            # [32, 64]
    b2 = b2_ref[...]            # [32, 1]   f32
    w3 = w3_ref[...]            # [8, 32]   (out rows padded to 8)
    b3 = b3_ref[...]            # [8, 1]    f32 (padded rows = -1e30)
    mxu_dtype = w1.dtype

    def chunk(c, carry):
        start = pl.multiple_of(c * cb, cb)
        x_c = x_ref[pl.ds(start, cb), :]                       # [cb, 8] batch-major

        # fc1 + ReLU: contract the shared `in` axis -> feature-major [64, cb].
        h1 = jax.lax.dot_general(w1, x_c, (((1,), (1,)), ((), ())),
                                 preferred_element_type=jnp.float32)
        h1 = jnp.maximum(h1 + b1, 0.0).astype(mxu_dtype)

        # fc2 + ReLU: [32, 64] @ [64, cb] -> [32, cb]
        h2 = jnp.dot(w2, h1, preferred_element_type=jnp.float32)
        h2 = jnp.maximum(h2 + b2, 0.0).astype(mxu_dtype)

        # fc3: [8, 32] @ [32, cb] -> [8, cb]; padded rows get bias -1e30.
        logits = jnp.dot(w3, h2, preferred_element_type=jnp.float32) + b3

        # Numerically-stable softmax over the feature (sublane) axis. Exact
        # division so rows sum to 1 to f32 precision (padded rows -> 0).
        m = jnp.max(logits, axis=0, keepdims=True)             # [1, cb]
        e = jnp.exp(logits - m)                                # [8, cb]
        denom = jnp.sum(e, axis=0, keepdims=True)              # [1, cb]
        out_ref[:, pl.ds(start, cb)] = e / denom
        return carry

    jax.lax.fori_loop(0, n_chunks, chunk, None, unroll=True)


def policy_network_forward(x, params, *, max_tb=MAX_TB,
                           compute_dtype=jnp.float32):
    """x: [B, input_size] f32. params: PyTorch-layout weights ([out,in]) / biases."""
    B, in_size = x.shape
    h1_size = params["w1"].shape[0]
    h2_size = params["w2"].shape[0]
    out_size = params["w3"].shape[0]
    out_pad = ((out_size + 7) // 8) * 8   # full-sublane output rows

    tb, Bp = _pick_batch_tile(B, max_tb)
    cb = min(512, tb)                     # column sub-chunk (bounds live ranges)

    # Keep x batch-major; at most one pad pass (no transpose round trip).
    xp = x.astype(compute_dtype)
    if Bp != B:
        xp = jnp.pad(xp, ((0, Bp - B), (0, 0)))

    w1 = params["w1"].astype(compute_dtype)
    w2 = params["w2"].astype(compute_dtype)
    w3 = jnp.pad(params["w3"].astype(compute_dtype),
                 ((0, out_pad - out_size), (0, 0)))
    b1 = params["b1"].astype(jnp.float32).reshape(-1, 1)
    b2 = params["b2"].astype(jnp.float32).reshape(-1, 1)
    # Padded output rows get a very negative bias -> softmax gives them 0.
    b3 = jnp.pad(params["b3"].astype(jnp.float32), (0, out_pad - out_size),
                 constant_values=-1e30).reshape(-1, 1)

    const = lambda i: (0, 0)              # weights/biases stay VMEM-resident

    itemsize = jnp.dtype(compute_dtype).itemsize
    cost = pl.CostEstimate(
        flops=2 * Bp * (in_size * h1_size + h1_size * h2_size
                        + h2_size * out_pad),
        transcendentals=out_pad * Bp,
        bytes_accessed=(Bp * in_size * itemsize            # x stream
                        + 4 * out_pad * Bp                 # output stream
                        + (w1.size + w2.size + w3.size) * itemsize
                        + 4 * (h1_size + h2_size + out_pad)),
    )

    kernel = functools.partial(policy_mlp_kernel, cb=cb, n_chunks=tb // cb)

    out_t = pl.pallas_call(
        kernel,
        out_shape=jax.ShapeDtypeStruct((out_pad, Bp), jnp.float32),
        grid=(Bp // tb,),
        in_specs=[
            pl.BlockSpec((tb, in_size), lambda i: (i, 0)),   # streamed x tile
            pl.BlockSpec((h1_size, in_size), const),
            pl.BlockSpec((h1_size, 1), const),
            pl.BlockSpec((h2_size, h1_size), const),
            pl.BlockSpec((h2_size, 1), const),
            pl.BlockSpec((out_pad, h2_size), const),
            pl.BlockSpec((out_pad, 1), const),
        ],
        out_specs=pl.BlockSpec((out_pad, tb), lambda i: (0, i)),
        compiler_params=pltpu.CompilerParams(
            dimension_semantics=("parallel",)),
        cost_estimate=cost,
    )(xp, w1, b1, w2, b2, w3, b3)

    # Drop row/column padding and return the module's [B, out] layout.
    return out_t[:out_size, :B].T


def init_params(key, input_size=8, output_size=3):
    """Deterministic synthetic init (PyTorch Linear shapes: W [out,in], b [out])."""
    ks = jax.random.split(key, 6)

    def lin(kw, kb, fan_in, fan_out):
        bound = 1.0 / jnp.sqrt(fan_in)
        w = jax.random.uniform(kw, (fan_out, fan_in), jnp.float32, -bound, bound)
        b = jax.random.uniform(kb, (fan_out,), jnp.float32, -bound, bound)
        return w, b

    w1, b1 = lin(ks[0], ks[1], input_size, 64)
    w2, b2 = lin(ks[2], ks[3], 64, 32)
    w3, b3 = lin(ks[4], ks[5], 32, output_size)
    return {"w1": w1, "b1": b1, "w2": w2, "b2": b2, "w3": w3, "b3": b3}


def reference_forward(x, params):
    hp = jax.lax.Precision.HIGHEST
    h1 = jnp.maximum(jnp.dot(x, params["w1"].T, precision=hp) + params["b1"], 0.0)
    h2 = jnp.maximum(jnp.dot(h1, params["w2"].T, precision=hp) + params["b2"], 0.0)
    return jax.nn.softmax(jnp.dot(h2, params["w3"].T, precision=hp) + params["b3"],
                          axis=-1)


if __name__ == "__main__":
    key = jax.random.PRNGKey(0)
    k_params, k_x = jax.random.split(key)

    input_size, output_size, batch = 8, 3, 2
    params = init_params(k_params, input_size, output_size)
    x = jax.random.normal(k_x, (batch, input_size), jnp.float32)
    ref = reference_forward(x, params)

    # f32 path (tight tolerance).
    probs = jax.block_until_ready(policy_network_forward(x, params))
    assert probs.shape == (batch, output_size)
    assert jnp.allclose(probs, ref, atol=1e-3, rtol=1e-3), "f32 mismatch vs reference"
    assert jnp.allclose(jnp.sum(probs, axis=-1), 1.0, atol=1e-5), "rows must sum to 1"

    # bf16 MXU-feed path (halves the dominant HBM stream; looser tolerance).
    probs_bf16 = jax.block_until_ready(
        policy_network_forward(x, params, compute_dtype=jnp.bfloat16))
    assert probs_bf16.shape == (batch, output_size)
    assert jnp.allclose(probs_bf16, ref, atol=3e-2, rtol=3e-2), "bf16 mismatch"
    assert jnp.allclose(jnp.sum(probs_bf16, axis=-1), 1.0, atol=1e-4)

    # Larger batch: exercises padding + a multi-step "parallel" grid axis.
    xb = jax.random.normal(jax.random.PRNGKey(1), (600, input_size), jnp.float32)
    refb = reference_forward(xb, params)
    probsb = jax.block_until_ready(policy_network_forward(xb, params))
    assert probsb.shape == (600, output_size)
    assert jnp.allclose(probsb, refb, atol=1e-3, rtol=1e-3), "multi-tile mismatch"
    assert jnp.allclose(jnp.sum(probsb, axis=-1), 1.0, atol=1e-5)

    print("KERNEL_OK")
</pallas_src>

<mosaic_0001>
module attributes {stable_mosaic.version = 11 : i64} {
  func.func @policy_mlp_kernel(%arg0: i32, %arg1: memref<256x8xf32, #tpu.memory_space<vmem>>, %arg2: memref<64x8xf32, #tpu.memory_space<vmem>>, %arg3: memref<64x1xf32, #tpu.memory_space<vmem>>, %arg4: memref<32x64xf32, #tpu.memory_space<vmem>>, %arg5: memref<32x1xf32, #tpu.memory_space<vmem>>, %arg6: memref<8x32xf32, #tpu.memory_space<vmem>>, %arg7: memref<8x1xf32, #tpu.memory_space<vmem>>, %arg8: memref<8x256xf32, #tpu.memory_space<vmem>>) attributes {dimension_semantics = [#tpu.dimension_semantics<parallel>], iteration_bounds = array<i64: 1>, scalar_prefetch = 0 : i64, scratch_operands = 0 : i64, tpu.core_type = #tpu.core_type<tc>, window_params = [{transform_indices = @transform_0, window_bounds = array<i64: 256, 8>}, {pipeline_mode = #tpu.pipeline_mode<synchronous>, transform_indices = @transform_1, window_bounds = array<i64: 64, 8>}, {pipeline_mode = #tpu.pipeline_mode<synchronous>, transform_indices = @transform_2, window_bounds = array<i64: 64, 1>}, {pipeline_mode = #tpu.pipeline_mode<synchronous>, transform_indices = @transform_3, window_bounds = array<i64: 32, 64>}, {pipeline_mode = #tpu.pipeline_mode<synchronous>, transform_indices = @transform_4, window_bounds = array<i64: 32, 1>}, {pipeline_mode = #tpu.pipeline_mode<synchronous>, transform_indices = @transform_5, window_bounds = array<i64: 8, 32>}, {pipeline_mode = #tpu.pipeline_mode<synchronous>, transform_indices = @transform_6, window_bounds = array<i64: 8, 1>}, {transform_indices = @transform_7, window_bounds = array<i64: 8, 256>}]} {
    %c0 = arith.constant 0 : index
    %c0_0 = arith.constant 0 : index
    %0 = vector.load %arg2[%c0, %c0_0] : memref<64x8xf32, #tpu.memory_space<vmem>>, vector<64x8xf32>
    %c0_1 = arith.constant 0 : index
    %c0_2 = arith.constant 0 : index
    %1 = vector.load %arg3[%c0_1, %c0_2] : memref<64x1xf32, #tpu.memory_space<vmem>>, vector<64x1xf32>
    %c0_3 = arith.constant 0 : index
    %c0_4 = arith.constant 0 : index
    %2 = vector.load %arg4[%c0_3, %c0_4] : memref<32x64xf32, #tpu.memory_space<vmem>>, vector<32x64xf32>
    %c0_5 = arith.constant 0 : index
    %c0_6 = arith.constant 0 : index
    %3 = vector.load %arg5[%c0_5, %c0_6] : memref<32x1xf32, #tpu.memory_space<vmem>>, vector<32x1xf32>
    %c0_7 = arith.constant 0 : index
    %c0_8 = arith.constant 0 : index
    %4 = vector.load %arg6[%c0_7, %c0_8] : memref<8x32xf32, #tpu.memory_space<vmem>>, vector<8x32xf32>
    %c0_9 = arith.constant 0 : index
    %c0_10 = arith.constant 0 : index
    %5 = vector.load %arg7[%c0_9, %c0_10] : memref<8x1xf32, #tpu.memory_space<vmem>>, vector<8x1xf32>
    %c0_i32 = arith.constant 0 : i32
    %c256_i32 = arith.constant 256 : i32
    %6 = arith.muli %c0_i32, %c256_i32 : i32
    %7 = tpu.assume_multiple %6, 256 : i32
    %8 = arith.index_cast %7 : i32 to index
    %c0_11 = arith.constant 0 : index
    %9 = vector.load %arg1[%8, %c0_11] : memref<256x8xf32, #tpu.memory_space<vmem>>, vector<256x8xf32>
    %cst = arith.constant dense<0.000000e+00> : vector<64x256xf32>
    %10 = tpu.matmul %0, %9, %cst {dimension_numbers = #tpu.dot_dimension_numbers<[1], [1], [0], [0], [0, 0, 1, 0], [], []>} : vector<64x8xf32>, vector<256x8xf32>, vector<64x256xf32> -> vector<64x256xf32>
    %11 = vector.broadcast %1 : vector<64x1xf32> to vector<64x256xf32>
    %12 = arith.addf %10, %11 : vector<64x256xf32>
    %cst_12 = arith.constant 0.000000e+00 : f32
    %13 = vector.broadcast %cst_12 : f32 to vector<64x256xf32>
    %14 = arith.maximumf %12, %13 : vector<64x256xf32>
    %cst_13 = arith.constant dense<0.000000e+00> : vector<32x256xf32>
    %15 = tpu.matmul %2, %14, %cst_13 {dimension_numbers = #tpu.dot_dimension_numbers<[1], [0], [0], [1], [0, 0, 1, 1], [], []>} : vector<32x64xf32>, vector<64x256xf32>, vector<32x256xf32> -> vector<32x256xf32>
    %16 = vector.broadcast %3 : vector<32x1xf32> to vector<32x256xf32>
    %17 = arith.addf %15, %16 : vector<32x256xf32>
    %cst_14 = arith.constant 0.000000e+00 : f32
    %18 = vector.broadcast %cst_14 : f32 to vector<32x256xf32>
    %19 = arith.maximumf %17, %18 : vector<32x256xf32>
    %cst_15 = arith.constant dense<0.000000e+00> : vector<8x256xf32>
    %20 = tpu.matmul %4, %19, %cst_15 {dimension_numbers = #tpu.dot_dimension_numbers<[1], [0], [0], [1], [0, 0, 1, 1], [], []>} : vector<8x32xf32>, vector<32x256xf32>, vector<8x256xf32> -> vector<8x256xf32>
    %21 = vector.broadcast %5 : vector<8x1xf32> to vector<8x256xf32>
    %22 = arith.addf %20, %21 : vector<8x256xf32>
    %cst_16 = arith.constant dense<0xFF800000> : vector<256xf32>
    %23 = vector.multi_reduction <maximumf>, %22, %cst_16 [0] : vector<8x256xf32> to vector<256xf32>
    %24 = vector.shape_cast %23 : vector<256xf32> to vector<1x256xf32>
    %25 = vector.broadcast %24 : vector<1x256xf32> to vector<8x256xf32>
    %26 = arith.subf %22, %25 : vector<8x256xf32>
    %27 = math.exp %26 : vector<8x256xf32>
    %cst_17 = arith.constant dense<0.000000e+00> : vector<256xf32>
    %28 = vector.multi_reduction <add>, %27, %cst_17 [0] : vector<8x256xf32> to vector<256xf32>
    %29 = vector.shape_cast %28 : vector<256xf32> to vector<1x256xf32>
    %30 = vector.broadcast %29 : vector<1x256xf32> to vector<8x256xf32>
    %31 = arith.divf %27, %30 : vector<8x256xf32>
    %c0_18 = arith.constant 0 : index
    %32 = arith.index_cast %7 : i32 to index
    %33 = vector.load %arg8[%c0_18, %32] : memref<8x256xf32, #tpu.memory_space<vmem>>, vector<8x256xf32>
    tpu.vector_store %arg8[%c0_18, %32], %31 {strides = array<i32>} : memref<8x256xf32, #tpu.memory_space<vmem>>, vector<8x256xf32>,
    %c1_i32 = arith.constant 1 : i32
    return
  }
  func.func @transform_0(%arg0: i32) -> (i32, i32) {
    %c0_i32 = arith.constant 0 : i32
    %c0_i32_0 = arith.constant 0 : i32
    return %arg0, %c0_i32 : i32, i32
  }
  func.func @transform_1(%arg0: i32) -> (i32, i32) {
    %c0_i32 = arith.constant 0 : i32
    %c0_i32_0 = arith.constant 0 : i32
    %c0_i32_1 = arith.constant 0 : i32
    return %c0_i32, %c0_i32_0 : i32, i32
  }
  func.func @transform_2(%arg0: i32) -> (i32, i32) {
    %c0_i32 = arith.constant 0 : i32
    %c0_i32_0 = arith.constant 0 : i32
    %c0_i32_1 = arith.constant 0 : i32
    return %c0_i32, %c0_i32_0 : i32, i32
  }
  func.func @transform_3(%arg0: i32) -> (i32, i32) {
    %c0_i32 = arith.constant 0 : i32
    %c0_i32_0 = arith.constant 0 : i32
    %c0_i32_1 = arith.constant 0 : i32
    return %c0_i32, %c0_i32_0 : i32, i32
  }
  func.func @transform_4(%arg0: i32) -> (i32, i32) {
    %c0_i32 = arith.constant 0 : i32
    %c0_i32_0 = arith.constant 0 : i32
    %c0_i32_1 = arith.constant 0 : i32
    return %c0_i32, %c0_i32_0 : i32, i32
  }
  func.func @transform_5(%arg0: i32) -> (i32, i32) {
    %c0_i32 = arith.constant 0 : i32
    %c0_i32_0 = arith.constant 0 : i32
    %c0_i32_1 = arith.constant 0 : i32
    return %c0_i32, %c0_i32_0 : i32, i32
  }
  func.func @transform_6(%arg0: i32) -> (i32, i32) {
    %c0_i32 = arith.constant 0 : i32
    %c0_i32_0 = arith.constant 0 : i32
    %c0_i32_1 = arith.constant 0 : i32
    return %c0_i32, %c0_i32_0 : i32, i32
  }
  func.func @transform_7(%arg0: i32) -> (i32, i32) {
    %c0_i32 = arith.constant 0 : i32
    %c0_i32_0 = arith.constant 0 : i32
    return %c0_i32, %arg0 : i32, i32
  }
}

</mosaic_0001>

<llo_original>
// kernel: tpu_custom_call.1
$region0: #{tpu_custom_call.1}
  #allocation0 [shape = 'u32[]', space=smem, size = 0x4, offset = 0x4, fixed_abs, tag = 'smem constant byte address 0x4 - core index']
  #allocation1 [shape = 'u32[72,128]{1,0:T(1,128)}', space=vmem, size = 0x9000, scoped, tag = 'internal scratch']
  %s0 = inlined_call_operand.vmem [shape: f32[256,8], index: 0, kind: input, shape index: {}]
  %s1 = inlined_call_operand.vmem [shape: f32[64,8], index: 1, kind: input, shape index: {}]
  %s2 = inlined_call_operand.vmem [shape: f32[64,1], index: 2, kind: input, shape index: {}]
  %s3 = inlined_call_operand.vmem [shape: f32[32,64], index: 3, kind: input, shape index: {}]
  %s4 = inlined_call_operand.vmem [shape: f32[32,1], index: 4, kind: input, shape index: {}]
  %s5 = inlined_call_operand.vmem [shape: f32[8,32], index: 5, kind: input, shape index: {}]
  %s6 = inlined_call_operand.vmem [shape: f32[8,1], index: 6, kind: input, shape index: {}]
  %s7 = inlined_call_operand.hbm [shape: f32[8,256], index: 7, kind: output, shape index: {}]
  %s8 = sld [smem:[#allocation0]]
  $region38: #{tpu_custom_call.1} parent=0
    _
  %s10 = ssub.s32 1, %s8
  %s11 = scalar_select 0, %s10, %s8
  $region1: #{tpu_custom_call.1} parent=0
    #allocation2 [shape = 'u8[8192]{0}', space=vmem, size = 0x2000, scoped, tag = 'output window, operand 0, single buffered']
    #allocation3 [shape = 's32[1]{0}', space=sflag, size = 0x4, scoped, tag = 'scoped memory for tpu_custom_call.1']
    %12 = vsyncpa [#allocation3], 0
    // Predicated region
    $region2: #{tpu_custom_call.1} parent=1 // pred_check
      _
    $region3: #{tpu_custom_call.1} parent=1 // pred_check_branch
      %14 = sbr.rel (0) target = $region5
    $region4: #{tpu_custom_call.1} parent=1 // pred_region
      _
    $region5: #{tpu_custom_call.1} parent=1 // pred_fallthru
      _
    // Predicated region
    $region6: #{tpu_custom_call.1} parent=1 // pred_check
      _
    $region7: #{tpu_custom_call.1} parent=1 // pred_check_branch
      %16 = sbr.rel (0) target = $region9
    $region8: #{tpu_custom_call.1} parent=1 // pred_region
      _
    $region9: #{tpu_custom_call.1} parent=1 // pred_fallthru
      _
    // Predicated region
    $region10: #{tpu_custom_call.1} parent=1 // pred_check
      _
    $region11: #{tpu_custom_call.1} parent=1 // pred_check_branch
      %18 = sbr.rel (0) target = $region13
    $region12: #{tpu_custom_call.1} parent=1 // pred_region
      _
    $region13: #{tpu_custom_call.1} parent=1 // pred_fallthru
      _
    // Predicated region
    $region14: #{tpu_custom_call.1} parent=1 // pred_check
      _
    $region15: #{tpu_custom_call.1} parent=1 // pred_check_branch
      %20 = sbr.rel (0) target = $region17
    $region16: #{tpu_custom_call.1} parent=1 // pred_region
      _
    $region17: #{tpu_custom_call.1} parent=1 // pred_fallthru
      _
    // Predicated region
    $region18: #{tpu_custom_call.1} parent=1 // pred_check
      _
    $region19: #{tpu_custom_call.1} parent=1 // pred_check_branch
      %22 = sbr.rel (0) target = $region21
    $region20: #{tpu_custom_call.1} parent=1 // pred_region
      _
    $region21: #{tpu_custom_call.1} parent=1 // pred_fallthru
      _
    // Predicated region
    $region22: #{tpu_custom_call.1} parent=1 // pred_check
      _
    $region23: #{tpu_custom_call.1} parent=1 // pred_check_branch
      %24 = sbr.rel (0) target = $region25
    $region24: #{tpu_custom_call.1} parent=1 // pred_region
      _
    $region25: #{tpu_custom_call.1} parent=1 // pred_fallthru
      _
    // Predicated region
    $region26: #{tpu_custom_call.1} parent=1 // pred_check
      _
    $region27: #{tpu_custom_call.1} parent=1 // pred_check_branch
      %26 = sbr.rel (0) target = $region29
    $region28: #{tpu_custom_call.1} parent=1 // pred_region
      _
    $region29: #{tpu_custom_call.1} parent=1 // pred_fallthru
      _
    %v27 = vld [vmem:[%s1] sm:$0xff]
    %v28 = vld [vmem:[%s1 + $0x8] sm:$0xff]
    %v29 = vld [vmem:[%s1 + $0x10] sm:$0xff]
    %v30 = vld [vmem:[%s1 + $0x18] sm:$0xff]
    %v31 = vld [vmem:[%s1 + $0x20] sm:$0xff]
    %v32 = vld [vmem:[%s1 + $0x28] sm:$0xff]
    %v33 = vld [vmem:[%s1 + $0x30] sm:$0xff]
    %v34 = vld [vmem:[%s1 + $0x38] sm:$0xff]
    %v35 = vld [vmem:[%s2] sm:$0xff]
    %v36 = vld [vmem:[%s2 + $0x8] sm:$0xff]
    %v37 = vld [vmem:[%s2 + $0x10] sm:$0xff]
    %v38 = vld [vmem:[%s2 + $0x18] sm:$0xff]
    %v39 = vld [vmem:[%s2 + $0x20] sm:$0xff]
    %v40 = vld [vmem:[%s2 + $0x28] sm:$0xff]
    %v41 = vld [vmem:[%s2 + $0x30] sm:$0xff]
    %v42 = vld [vmem:[%s2 + $0x38] sm:$0xff]
    %v43 = vld [vmem:[%s3] sm:$0xff]
    %v44 = vld [vmem:[%s3 + $0x8] sm:$0xff]
    %v45 = vld [vmem:[%s3 + $0x10] sm:$0xff]
    %v46 = vld [vmem:[%s3 + $0x18] sm:$0xff]
    %v47 = vld [vmem:[%s4] sm:$0xff]
    %v48 = vld [vmem:[%s4 + $0x8] sm:$0xff]
    %v49 = vld [vmem:[%s4 + $0x10] sm:$0xff]
    %v50 = vld [vmem:[%s4 + $0x18] sm:$0xff]
    %v51 = vld [vmem:[%s5] sm:$0xff]
    %v52 = vld [vmem:[%s6] sm:$0xff]
    %v53 = vld [vmem:[%s0] sm:$0xff]
    %v54 = vld [vmem:[%s0 + $0x8] sm:$0xff]
    %v55 = vld [vmem:[%s0 + $0x10] sm:$0xff]
    %v56 = vld [vmem:[%s0 + $0x18] sm:$0xff]
    %v57 = vld [vmem:[%s0 + $0x20] sm:$0xff]
    %v58 = vld [vmem:[%s0 + $0x28] sm:$0xff]
    %v59 = vld [vmem:[%s0 + $0x30] sm:$0xff]
    %v60 = vld [vmem:[%s0 + $0x38] sm:$0xff]
    %v61 = vld [vmem:[%s0 + $0x40] sm:$0xff]
    %v62 = vld [vmem:[%s0 + $0x48] sm:$0xff]
    %v63 = vld [vmem:[%s0 + $0x50] sm:$0xff]
    %v64 = vld [vmem:[%s0 + $0x58] sm:$0xff]
    %v65 = vld [vmem:[%s0 + $0x60] sm:$0xff]
    %v66 = vld [vmem:[%s0 + $0x68] sm:$0xff]
    %v67 = vld [vmem:[%s0 + $0x70] sm:$0xff]
    %v68 = vld [vmem:[%s0 + $0x78] sm:$0xff]
    %v69 = vld [vmem:[%s0 + $0x80] sm:$0xff]
    %v70 = vld [vmem:[%s0 + $0x88] sm:$0xff]
    %v71 = vld [vmem:[%s0 + $0x90] sm:$0xff]
    %v72 = vld [vmem:[%s0 + $0x98] sm:$0xff]
    %v73 = vld [vmem:[%s0 + $0xa0] sm:$0xff]
    %v74 = vld [vmem:[%s0 + $0xa8] sm:$0xff]
    %v75 = vld [vmem:[%s0 + $0xb0] sm:$0xff]
    %v76 = vld [vmem:[%s0 + $0xb8] sm:$0xff]
    %v77 = vld [vmem:[%s0 + $0xc0] sm:$0xff]
    %v78 = vld [vmem:[%s0 + $0xc8] sm:$0xff]
    %v79 = vld [vmem:[%s0 + $0xd0] sm:$0xff]
    %v80 = vld [vmem:[%s0 + $0xd8] sm:$0xff]
    %v81 = vld [vmem:[%s0 + $0xe0] sm:$0xff]
    %v82 = vld [vmem:[%s0 + $0xe8] sm:$0xff]
    %v83 = vld [vmem:[%s0 + $0xf0] sm:$0xff]
    %v84 = vld [vmem:[%s0 + $0xf8] sm:$0xff]
    %86 = vset.pattern.permute.xlu0 0
    %87 = vperm.xlu0 %86, %v35
    %v88 = vpop.permute.xlu0 %87
    %91 = vset.pattern.permute.xlu0 0
    %92 = vperm.xlu0 %91, %v36
    %v93 = vpop.permute.xlu0 %92
    %96 = vset.pattern.permute.xlu0 0
    %97 = vperm.xlu0 %96, %v37
    %v98 = vpop.permute.xlu0 %97
    %101 = vset.pattern.permute.xlu0 0
    %102 = vperm.xlu0 %101, %v38
    %v103 = vpop.permute.xlu0 %102
    %106 = vset.pattern.permute.xlu0 0
    %107 = vperm.xlu0 %106, %v39
    %v108 = vpop.permute.xlu0 %107
    %111 = vset.pattern.permute.xlu0 0
    %112 = vperm.xlu0 %111, %v40
    %v113 = vpop.permute.xlu0 %112
    %116 = vset.pattern.permute.xlu0 0
    %117 = vperm.xlu0 %116, %v41
    %v118 = vpop.permute.xlu0 %117
    %121 = vset.pattern.permute.xlu0 0
    %122 = vperm.xlu0 %121, %v42
    %v123 = vpop.permute.xlu0 %122
    %vm125 = vcmask 64512
    %v127 = vsel %vm125, %v27, 0
    %v130 = vsel %vm125, %v28, 0
    %v133 = vsel %vm125, %v29, 0
    %v136 = vsel %vm125, %v30, 0
    %v139 = vsel %vm125, %v31, 0
    %v142 = vsel %vm125, %v32, 0
    %v145 = vsel %vm125, %v33, 0
    %v148 = vsel %vm125, %v34, 0
    %v151 = vsel %vm125, %v53, 0
    %v154 = vsel %vm125, %v54, 0
    %v157 = vsel %vm125, %v55, 0
    %v160 = vsel %vm125, %v56, 0
    %v163 = vsel %vm125, %v57, 0
    %v166 = vsel %vm125, %v58, 0
    %v169 = vsel %vm125, %v59, 0
    %v172 = vsel %vm125, %v60, 0
    %v175 = vsel %vm125, %v61, 0
    %v178 = vsel %vm125, %v62, 0
    %v181 = vsel %vm125, %v63, 0
    %v184 = vsel %vm125, %v64, 0
    %v187 = vsel %vm125, %v65, 0
    %v190 = vsel %vm125, %v66, 0
    %v193 = vsel %vm125, %v67, 0
    %v196 = vsel %vm125, %v68, 0
    %v199 = vsel %vm125, %v69, 0
    %v202 = vsel %vm125, %v70, 0
    %v205 = vsel %vm125, %v71, 0
    %v208 = vsel %vm125, %v72, 0
    %v211 = vsel %vm125, %v73, 0
    %v214 = vsel %vm125, %v74, 0
    %v217 = vsel %vm125, %v75, 0
    %v220 = vsel %vm125, %v76, 0
    %v223 = vsel %vm125, %v77, 0
    %v226 = vsel %vm125, %v78, 0
    %v229 = vsel %vm125, %v79, 0
    %v232 = vsel %vm125, %v80, 0
    %v235 = vsel %vm125, %v81, 0
    %v238 = vsel %vm125, %v82, 0
    %v241 = vsel %vm125, %v83, 0
    %v244 = vsel %vm125, %v84, 0
    %246 = vmatpush.xpose.msra.mxu0 %v196
    %247 = vmatpush.xpose.msra.mxu0 %v193
    %248 = vmatpush.xpose.msra.mxu0 %v190
    %249 = vmatpush.xpose.msra.mxu0 %v187
    %250 = vmatpush.xpose.msra.mxu0 %v184
    %251 = vmatpush.xpose.msra.mxu0 %v181
    %252 = vmatpush.xpose.msra.mxu0 %v178
    %253 = vmatpush.xpose.msra.mxu0 %v175
    %254 = vmatpush.xpose.msra.mxu0 %v172
    %255 = vmatpush.xpose.msra.mxu0 %v169
    %256 = vmatpush.xpose.msra.mxu0 %v166
    %257 = vmatpush.xpose.msra.mxu0 %v163
    %258 = vmatpush.xpose.msra.mxu0 %v160
    %259 = vmatpush.xpose.msra.mxu0 %v157
    %260 = vmatpush.xpose.msra.mxu0 %v154
    %261 = vmatpush.xpose.msra.mxu0 %v151
    %262 = vmatmul.f32.gmra.mxu0 %v127
    %v263 = vpop.f32.mrf.mxu0
    %v264 = vadd.f32 %v88, %v263
    %265 = vmatmul.f32.gmra.mxu0 %v130
    %v266 = vpop.f32.mrf.mxu0
    %v267 = vadd.f32 %v93, %v266
    %268 = vmatmul.f32.gmra.mxu0 %v133
    %v269 = vpop.f32.mrf.mxu0
    %v270 = vadd.f32 %v98, %v269
    %271 = vmatmul.f32.gmra.mxu0 %v136
    %v272 = vpop.f32.mrf.mxu0
    %v273 = vadd.f32 %v103, %v272
    %274 = vmatmul.f32.gmra.mxu0 %v139
    %v275 = vpop.f32.mrf.mxu0
    %v276 = vadd.f32 %v108, %v275
    %277 = vmatmul.f32.gmra.mxu0 %v142
    %v278 = vpop.f32.mrf.mxu0
    %v279 = vadd.f32 %v113, %v278
    %280 = vmatmul.f32.gmra.mxu0 %v145
    %v281 = vpop.f32.mrf.mxu0
    %v282 = vadd.f32 %v118, %v281
    %283 = vmatmul.f32.gmra.mxu0 %v148
    %v284 = vpop.f32.mrf.mxu0
    %v285 = vadd.f32 %v123, %v284
    %286 = vdwg.mxu0
    %287 = vmatpush.xpose.msra.mxu0 %v244
    %288 = vmatpush.xpose.msra.mxu0 %v241
    %289 = vmatpush.xpose.msra.mxu0 %v238
    %290 = vmatpush.xpose.msra.mxu0 %v235
    %291 = vmatpush.xpose.msra.mxu0 %v232
    %292 = vmatpush.xpose.msra.mxu0 %v229
    %293 = vmatpush.xpose.msra.mxu0 %v226
    %294 = vmatpush.xpose.msra.mxu0 %v223
    %295 = vmatpush.xpose.msra.mxu0 %v220
    %296 = vmatpush.xpose.msra.mxu0 %v217
    %297 = vmatpush.xpose.msra.mxu0 %v214
    %298 = vmatpush.xpose.msra.mxu0 %v211
    %299 = vmatpush.xpose.msra.mxu0 %v208
    %300 = vmatpush.xpose.msra.mxu0 %v205
    %301 = vmatpush.xpose.msra.mxu0 %v202
    %302 = vmatpush.xpose.msra.mxu0 %v199
    %303 = vmatmul.f32.gmra.mxu0 %v127
    %v304 = vpop.f32.mrf.mxu0
    %v305 = vadd.f32 %v88, %v304
    %306 = vmatmul.f32.gmra.mxu0 %v130
    %v307 = vpop.f32.mrf.mxu0
    %v308 = vadd.f32 %v93, %v307
    %309 = vmatmul.f32.gmra.mxu0 %v133
    %v310 = vpop.f32.mrf.mxu0
    %v311 = vadd.f32 %v98, %v310
    %312 = vmatmul.f32.gmra.mxu0 %v136
    %v313 = vpop.f32.mrf.mxu0
    %v314 = vadd.f32 %v103, %v313
    %315 = vmatmul.f32.gmra.mxu0 %v139
    %v316 = vpop.f32.mrf.mxu0
    %v317 = vadd.f32 %v108, %v316
    %318 = vmatmul.f32.gmra.mxu0 %v142
    %v319 = vpop.f32.mrf.mxu0
    %v320 = vadd.f32 %v113, %v319
    %321 = vmatmul.f32.gmra.mxu0 %v145
    %v322 = vpop.f32.mrf.mxu0
    %v323 = vadd.f32 %v118, %v322
    %324 = vmatmul.f32.gmra.mxu0 %v148
    %v325 = vpop.f32.mrf.mxu0
    %v326 = vadd.f32 %v123, %v325
    %327 = vdwg.mxu0
    %v328 = vmax.f32 %v264, 0.0
    %v329 = vmax.f32 %v305, 0.0
    %v330 = vmax.f32 %v267, 0.0
    %v331 = vmax.f32 %v308, 0.0
    %v332 = vmax.f32 %v270, 0.0
    %v333 = vmax.f32 %v311, 0.0
    %v334 = vmax.f32 %v273, 0.0
    %v335 = vmax.f32 %v314, 0.0
    %v336 = vmax.f32 %v276, 0.0
    %v337 = vmax.f32 %v317, 0.0
    %v338 = vmax.f32 %v279, 0.0
    %v339 = vmax.f32 %v320, 0.0
    %v340 = vmax.f32 %v282, 0.0
    %v341 = vmax.f32 %v323, 0.0
    %v342 = vmax.f32 %v285, 0.0
    %v343 = vmax.f32 %v326, 0.0
    %345 = vset.pattern.permute.xlu0 0
    %346 = vperm.xlu0 %345, %v47
    %v347 = vpop.permute.xlu0 %346
    %350 = vset.pattern.permute.xlu0 0
    %351 = vperm.xlu0 %350, %v48
    %v352 = vpop.permute.xlu0 %351
    %355 = vset.pattern.permute.xlu0 0
    %356 = vperm.xlu0 %355, %v49
    %v357 = vpop.permute.xlu0 %356
    %360 = vset.pattern.permute.xlu0 0
    %361 = vperm.xlu0 %360, %v50
    %v362 = vpop.permute.xlu0 %361
    %vm364 = vcmask 523264
    %v366 = vsel %vm364, %v43, 0
    %v369 = vsel %vm364, %v44, 0
    %v372 = vsel %vm364, %v45, 0
    %v375 = vsel %vm364, %v46, 0
    %377 = vmatpush.msra.mxu0 0.0
    %378 = vmatpush.msra.mxu0 0.0
    %379 = vmatpush.msra.mxu0 0.0
    %380 = vmatpush.msra.mxu0 0.0
    %381 = vmatpush.msra.mxu0 0.0
    %382 = vmatpush.msra.mxu0 0.0
    %383 = vmatpush.msra.mxu0 0.0
    %384 = vmatpush.msra.mxu0 0.0
    %385 = vmatpush.msra.mxu0 %v342
    %386 = vmatpush.msra.mxu0 %v340
    %387 = vmatpush.msra.mxu0 %v338
    %388 = vmatpush.msra.mxu0 %v336
    %389 = vmatpush.msra.mxu0 %v334
    %390 = vmatpush.msra.mxu0 %v332
    %391 = vmatpush.msra.mxu0 %v330
    %392 = vmatpush.msra.mxu0 %v328
    %393 = vmatmul.f32.gmra.mxu0 %v366
    %v394 = vpop.f32.mrf.mxu0
    %v395 = vadd.f32 %v347, %v394
    %396 = vmatmul.f32.gmra.mxu0 %v369
    %v397 = vpop.f32.mrf.mxu0
    %v398 = vadd.f32 %v352, %v397
    %399 = vmatmul.f32.gmra.mxu0 %v372
    %v400 = vpop.f32.mrf.mxu0
    %v401 = vadd.f32 %v357, %v400
    %402 = vmatmul.f32.gmra.mxu0 %v375
    %v403 = vpop.f32.mrf.mxu0
    %v404 = vadd.f32 %v362, %v403
    %405 = vdwg.mxu0
    %406 = vmatpush.msra.mxu0 0.0
    %407 = vmatpush.msra.mxu0 0.0
    %408 = vmatpush.msra.mxu0 0.0
    %409 = vmatpush.msra.mxu0 0.0
    %410 = vmatpush.msra.mxu0 0.0
    %411 = vmatpush.msra.mxu0 0.0
    %412 = vmatpush.msra.mxu0 0.0
    %413 = vmatpush.msra.mxu0 0.0
    %414 = vmatpush.msra.mxu0 %v343
    %415 = vmatpush.msra.mxu0 %v341
    %416 = vmatpush.msra.mxu0 %v339
    %417 = vmatpush.msra.mxu0 %v337
    %418 = vmatpush.msra.mxu0 %v335
    %419 = vmatpush.msra.mxu0 %v333
    %420 = vmatpush.msra.mxu0 %v331
    %421 = vmatpush.msra.mxu0 %v329
    %422 = vmatmul.f32.gmra.mxu0 %v366
    %v423 = vpop.f32.mrf.mxu0
    %v424 = vadd.f32 %v347, %v423
    %425 = vmatmul.f32.gmra.mxu0 %v369
    %v426 = vpop.f32.mrf.mxu0
    %v427 = vadd.f32 %v352, %v426
    %428 = vmatmul.f32.gmra.mxu0 %v372
    %v429 = vpop.f32.mrf.mxu0
    %v430 = vadd.f32 %v357, %v429
    %431 = vmatmul.f32.gmra.mxu0 %v375
    %v432 = vpop.f32.mrf.mxu0
    %v433 = vadd.f32 %v362, %v432
    %434 = vdwg.mxu0
    %v435 = vmax.f32 %v395, 0.0
    %v436 = vmax.f32 %v424, 0.0
    %v437 = vmax.f32 %v398, 0.0
    %v438 = vmax.f32 %v427, 0.0
    %v439 = vmax.f32 %v401, 0.0
    %v440 = vmax.f32 %v430, 0.0
    %v441 = vmax.f32 %v404, 0.0
    %v442 = vmax.f32 %v433, 0.0
    %444 = vset.pattern.permute.xlu0 0
    %445 = vperm.xlu0 %444, %v52
    %v446 = vpop.permute.xlu0 %445
    %vm448 = vcmask 261120
    %v450 = vsel %vm448, %v51, 0
    %452 = vmatpush.msra.mxu0 0.0
    %453 = vmatpush.msra.mxu0 0.0
    %454 = vmatpush.msra.mxu0 0.0
    %455 = vmatpush.msra.mxu0 0.0
    %456 = vmatpush.msra.mxu0 0.0
    %457 = vmatpush.msra.mxu0 0.0
    %458 = vmatpush.msra.mxu0 0.0
    %459 = vmatpush.msra.mxu0 0.0
    %460 = vmatpush.msra.mxu0 0.0
    %461 = vmatpush.msra.mxu0 0.0
    %462 = vmatpush.msra.mxu0 0.0
    %463 = vmatpush.msra.mxu0 0.0
    %464 = vmatpush.msra.mxu0 %v441
    %465 = vmatpush.msra.mxu0 %v439
    %466 = vmatpush.msra.mxu0 %v437
    %467 = vmatpush.msra.mxu0 %v435
    %468 = vmatmul.f32.gmra.mxu0 %v450
    %v469 = vpop.f32.mrf.mxu0
    %v470 = vadd.f32 %v446, %v469
    %471 = vdwg.mxu0
    %472 = vmatpush.msra.mxu0 0.0
    %473 = vmatpush.msra.mxu0 0.0
    %474 = vmatpush.msra.mxu0 0.0
    %475 = vmatpush.msra.mxu0 0.0
    %476 = vmatpush.msra.mxu0 0.0
    %477 = vmatpush.msra.mxu0 0.0
    %478 = vmatpush.msra.mxu0 0.0
    %479 = vmatpush.msra.mxu0 0.0
    %480 = vmatpush.msra.mxu0 0.0
    %481 = vmatpush.msra.mxu0 0.0
    %482 = vmatpush.msra.mxu0 0.0
    %483 = vmatpush.msra.mxu0 0.0
    %484 = vmatpush.msra.mxu0 %v442
    %485 = vmatpush.msra.mxu0 %v440
    %486 = vmatpush.msra.mxu0 %v438
    %487 = vmatpush.msra.mxu0 %v436
    %488 = vmatmul.f32.gmra.mxu0 %v450
    %v489 = vpop.f32.mrf.mxu0
    %v490 = vadd.f32 %v446, %v489
    %491 = vdwg.mxu0
    %v492 = vrot.slane %v470, 4
    %v493 = vmax.f32 %v470, %v492
    %v494 = vrot.slane %v493, 2
    %v495 = vmax.f32 %v493, %v494
    %v496 = vrot.slane %v495, 1
    %v497 = vmax.f32 %v495, %v496
    %v498 = vrot.slane %v490, 4
    %v499 = vmax.f32 %v490, %v498
    %v500 = vrot.slane %v499, 2
    %v501 = vmax.f32 %v499, %v500
    %v502 = vrot.slane %v501, 1
    %v503 = vmax.f32 %v501, %v502
    %v504 = vsub.f32 %v470, %v497
    %v505 = vsub.f32 %v490, %v503
    %v506 = vmul.f32 %v504, 1.442695
    %v507 = vpow.pop %v506
    %v508 = vmul.f32 %v505, 1.442695
    %v509 = vpow.pop %v508
    %v510 = vrot.slane %v507, 4
    %v511 = vadd.f32 %v507, %v510
    %v512 = vrot.slane %v511, 2
    %v513 = vadd.f32 %v511, %v512
    %v514 = vrot.slane %v513, 1
    %v515 = vadd.f32 %v513, %v514
    %v516 = vrot.slane %v509, 4
    %v517 = vadd.f32 %v509, %v516
    %v518 = vrot.slane %v517, 2
    %v519 = vadd.f32 %v517, %v518
    %v520 = vrot.slane %v519, 1
    %v521 = vadd.f32 %v519, %v520
    %v522 = vrcp.pop %v515
    %v523 = vmul.f32 %v515, %v522
    %v524 = vsub.f32 1.0, %v523
    %v525 = vmul.f32 %v522, %v524
    %v526 = vadd.f32 %v522, %v525
    %vm527 = vweird.f32 %v515
    %vm528 = vweird.f32 %v522
    %vm529 = vmor %vm527, %vm528
    %v530 = vsel %vm529, %v522, %v526
    %v531 = vand.u32 2147483647, %v515
    %vm532 = vcmp.eq.f32.partialorder %v531, 8.507059e+37
    %v533 = vand.u32 %v515, 2147483648
    %v534 = vor.u32 1.1754944e-38, %v533
    %v535 = vsel %vm532, %v534, %v530
    %v536 = vmul.f32 %v507, %v535
    %v537 = vrcp.pop %v521
    %v538 = vmul.f32 %v521, %v537
    %v539 = vsub.f32 1.0, %v538
    %v540 = vmul.f32 %v537, %v539
    %v541 = vadd.f32 %v537, %v540
    %vm542 = vweird.f32 %v521
    %vm543 = vweird.f32 %v537
    %vm544 = vmor %vm542, %vm543
    %v545 = vsel %vm544, %v537, %v541
    %v546 = vand.u32 2147483647, %v521
    %vm547 = vcmp.eq.f32.partialorder %v546, 8.507059e+37
    %v548 = vand.u32 %v521, 2147483648
    %v549 = vor.u32 1.1754944e-38, %v548
    %v550 = vsel %vm547, %v549, %v545
    %v551 = vmul.f32 %v509, %v550
    %552 = vst [vmem:[#allocation2] sm:$0xff] %v536
    %553 = vst [vmem:[#allocation2 + $0x8] sm:$0xff] %v551
    // Predicated region
    $region30: #{tpu_custom_call.1} parent=1 // pred_check
      _
    $region31: #{tpu_custom_call.1} parent=1 // pred_check_branch
      %555 = sbr.rel (0) target = $region33
    $region32: #{tpu_custom_call.1} parent=1 // pred_region
      %557 = vsyncadd [#allocation3], 0
      %s559 = sshll.u32 [#allocation2], 4
      %s560 = int_to_ptr.vmem [resolvable:$true] %s559
      %s561 = sshll.u32 %s7, 4
      %s562 = int_to_ptr.hbm [resolvable:$true] %s561
      %564 = dma.vmem_to_hbm [thread:$0]  %s560, 256, %s562, [#allocation3]
    $region33: #{tpu_custom_call.1} parent=1 // pred_fallthru
      _
    // Predicated region
    $region34: #{tpu_custom_call.1} parent=1 // pred_check
      _
    $region35: #{tpu_custom_call.1} parent=1 // pred_check_branch
      %566 = sbr.rel (0) target = $region37
    $region36: #{tpu_custom_call.1} parent=1 // pred_region
      %568 = dma.done [#allocation3], 256
    $region37: #{tpu_custom_call.1} parent=1 // pred_fallthru
      _
    %569 = vsyncpa [#allocation3], 1

</llo_original>
